<compile_context>
chip_gen: v7x
topology: tpu7x:2x2x1
jax: 0.10.0
libtpu: 0.0.40
codegen_flags: <defaults>
</compile_context>

<pallas_src>
import functools

import jax
import jax.numpy as jnp
from jax.experimental import pallas as pl
from jax.experimental.pallas import tpu as pltpu

MARGIN = 0.5
POSITION = (0, 170, 341, 512)


def _round_up(v, m):
    return ((v + m - 1) // m) * m


def _softplus(z):
    # numerically stable log(1 + exp(z))
    return jnp.maximum(z, 0.0) + jnp.log1p(jnp.exp(-jnp.abs(z)))


def _branch_kernel(x_ref, lq_ref, lk_ref, out_ref, *, margin, n, tm):
    # x_ref  : (1, N_pad, Wp) bf16 -- one branch, rows + feature dim zero padded
    # lq_ref : (N_pad, 1) int32    -- labels, column layout (query side)
    # lk_ref : (1, N_pad) int32    -- labels, row layout (key side)
    # out_ref: (1, 8, 128) f32     -- per-branch raw sums, accumulated over row tiles
    #   rows: [loss_sum, skip_cnt, pos_sim_sum, neg_sim_sum, pos_cnt, neg_cnt, 0, 0]
    r = pl.program_id(1)
    start = pl.multiple_of(r * tm, tm)

    x = x_ref[0]                                   # (N_pad, Wp) bf16 keys (resident)
    n_pad = x.shape[0]
    q = x_ref[0, pl.ds(start, tm), :]              # (TM, Wp) bf16 query rows

    # Gram tile on the MXU: bf16 inputs, f32 accumulation.
    sim = jax.lax.dot_general(
        q, x, (((1,), (1,)), ((), ())), preferred_element_type=jnp.float32
    )  # (TM, N_pad) f32

    # Masks rebuilt in-kernel from the label vector (no N^2 mask DMA).
    lq = lq_ref[pl.ds(start, tm), :]               # (TM, 1) int32
    lk = lk_ref[...]                               # (1, N_pad) int32
    eq = lq == lk                                  # (TM, N_pad) bool
    row_g = start + jax.lax.broadcasted_iota(jnp.int32, (tm, n_pad), 0)
    col = jax.lax.broadcasted_iota(jnp.int32, (tm, n_pad), 1)
    valid = (row_g < n) & (col < n)                # excludes zero-padded rows/cols
    pos_b = eq & (row_g != col) & valid            # same label, i != j
    neg_b = jnp.logical_not(eq) & valid            # different label
    pos_m = pos_b.astype(jnp.float32)
    neg_m = neg_b.astype(jnp.float32)

    big = jnp.float32(1e30)
    # minimum positive similarity per anchor row (columns span all keys)
    min_pos = jnp.min(jnp.where(pos_b, sim, big), axis=1, keepdims=True)   # (TM,1)
    # hard-negative selection: negatives with sim + 0.05 > min positive sim
    sel_neg = neg_m * (sim + 0.05 > min_pos).astype(jnp.float32)

    pos_cnt = jnp.sum(pos_m, axis=1, keepdims=True)
    sel_cnt = jnp.sum(sel_neg, axis=1, keepdims=True)

    d = sim - margin                               # hoisted, shared by both softplus args
    pos_loss = jnp.sum(pos_m * _softplus(-2.0 * d), axis=1, keepdims=True)
    pos_loss = pos_loss / jnp.maximum(pos_cnt, 1.0)
    neg_loss = jnp.sum(sel_neg * _softplus(50.0 * d), axis=1, keepdims=True)
    neg_loss = 0.04 * neg_loss / jnp.maximum(sel_cnt, 1.0)

    row_valid = (row_g[:, :1] < n).astype(jnp.float32)   # (TM,1) real rows only
    has_neg = (sel_cnt > 0).astype(jnp.float32)          # rows not skipped

    loss_part = jnp.sum(row_valid * has_neg * (pos_loss + neg_loss))
    skip_part = jnp.sum(row_valid * (1.0 - has_neg))
    pos_sim_part = jnp.sum(pos_m * sim)
    neg_sim_part = jnp.sum(neg_m * sim)
    pos_cnt_part = jnp.sum(pos_m)
    neg_cnt_part = jnp.sum(neg_m)

    ridx = jax.lax.broadcasted_iota(jnp.int32, (8, 128), 0)
    stats = jnp.where(ridx == 0, loss_part, 0.0)
    stats = jnp.where(ridx == 1, skip_part, stats)
    stats = jnp.where(ridx == 2, pos_sim_part, stats)
    stats = jnp.where(ridx == 3, neg_sim_part, stats)
    stats = jnp.where(ridx == 4, pos_cnt_part, stats)
    stats = jnp.where(ridx == 5, neg_cnt_part, stats)

    @pl.when(r == 0)
    def _():
        out_ref[0] = jnp.zeros_like(out_ref[0])

    out_ref[0] += stats


def dist_weight_dev_branch_loss(inputs, targets, margin=MARGIN, position=POSITION):
    """inputs: (N, D) float, targets: (N,) int. Returns (loss, prec, pos_d, neg_d)."""
    n, d = inputs.shape
    assert d == position[-1], "feature dim must match position[-1]"
    nb = len(position) - 1
    widths = [position[i + 1] - position[i] for i in range(nb)]
    wp = max(128, _round_up(max(widths), 128))

    # Row-tile size: 128 for large batches, else the padded batch itself
    # (16 keeps bf16 sublane packing aligned).
    tm = 128 if n >= 128 else _round_up(n, 16)
    n_pad = _round_up(n, tm)
    n_row_tiles = n_pad // tm

    # glue: slice branches, zero-pad rows + feature dim, cast to bf16 for the MXU.
    branches = []
    for i in range(nb):
        sl = inputs[:, position[i]:position[i + 1]].astype(jnp.float32)
        sl = jnp.pad(sl, ((0, n_pad - n), (0, wp - widths[i])))
        branches.append(sl)
    xb = jnp.stack(branches, axis=0).astype(jnp.bfloat16)   # (nb, N_pad, Wp)

    # glue: tiny padded label vector in the two layouts the kernel needs.
    lbl = jnp.pad(targets.astype(jnp.int32), (0, n_pad - n))
    lbl_col = lbl[:, None]      # (N_pad, 1)
    lbl_row = lbl[None, :]      # (1, N_pad)

    kernel = functools.partial(
        _branch_kernel, margin=float(margin), n=int(n), tm=int(tm)
    )
    out = pl.pallas_call(
        kernel,
        out_shape=jax.ShapeDtypeStruct((nb, 8, 128), jnp.float32),
        grid_spec=pltpu.PrefetchScalarGridSpec(
            num_scalar_prefetch=0,
            grid=(nb, n_row_tiles),
            in_specs=[
                pl.BlockSpec((1, n_pad, wp), lambda b, r: (b, 0, 0)),
                pl.BlockSpec((n_pad, 1), lambda b, r: (0, 0)),
                pl.BlockSpec((1, n_pad), lambda b, r: (0, 0)),
            ],
            out_specs=pl.BlockSpec((1, 8, 128), lambda b, r: (b, 0, 0)),
        ),
        compiler_params=pltpu.CompilerParams(
            dimension_semantics=("parallel", "arbitrary")
        ),
    )(xb, lbl_col, lbl_row)

    sums = out[:, :, 0]  # (nb, 8) raw per-branch sums (lanes are identical)
    nf = jnp.float32(n)
    loss_b = sums[:, 0] / nf
    prec_b = sums[:, 1] / nf
    pos_d_b = sums[:, 2] / jnp.maximum(sums[:, 4], 1.0)
    neg_d_b = sums[:, 3] / jnp.maximum(sums[:, 5], 1.0)

    loss = jnp.mean(loss_b)    # == torch.mean(torch.cat(loss_list))
    prec = jnp.mean(prec_b)    # == np.mean(prec_list)
    pos_d = jnp.mean(pos_d_b)
    neg_d = jnp.mean(neg_d_b)
    # TODO(synk): the reference repo's stochastic distance-weighted negative
    # *sampling* variant (torch.multinomial) has no deterministic equivalent;
    # the deterministic hard-negative selection of DistWeightBinDevianceLoss is
    # implemented instead.
    return loss, prec, pos_d, neg_d


if __name__ == "__main__":
    key = jax.random.PRNGKey(0)
    n = 8                      # batch: 4 classes x 2 instances
    d = POSITION[-1]           # 512, as implied by the default positions
    x = jax.random.normal(key, (n, d), dtype=jnp.float32)
    x = x / jnp.linalg.norm(x, axis=1, keepdims=True)  # L2-normalized embeddings
    targets = jnp.array([0, 0, 1, 1, 2, 2, 3, 3], dtype=jnp.int32)

    loss, prec, pos_d, neg_d = dist_weight_dev_branch_loss(x, targets)
    jax.block_until_ready((loss, prec, pos_d, neg_d))
    print("KERNEL_OK")
</pallas_src>

<mosaic_0001>
module attributes {stable_mosaic.version = 11 : i64} {
  func.func @_branch_kernel(%arg0: i32, %arg1: i32, %arg2: memref<1x16x256xbf16, #tpu.memory_space<vmem>>, %arg3: memref<16x1xi32, #tpu.memory_space<vmem>>, %arg4: memref<1x16xi32, #tpu.memory_space<vmem>>, %arg5: memref<1x8x128xf32, #tpu.memory_space<vmem>>) attributes {dimension_semantics = [#tpu.dimension_semantics<parallel>, #tpu.dimension_semantics<arbitrary>], iteration_bounds = array<i64: 3, 1>, scalar_prefetch = 0 : i64, scratch_operands = 0 : i64, tpu.core_type = #tpu.core_type<tc>, window_params = [{transform_indices = @transform_0, window_bounds = array<i64: 1, 16, 256>}, {pipeline_mode = #tpu.pipeline_mode<synchronous>, transform_indices = @transform_1, window_bounds = array<i64: 16, 1>}, {pipeline_mode = #tpu.pipeline_mode<synchronous>, transform_indices = @transform_2, window_bounds = array<i64: 1, 16>}, {transform_indices = @transform_3, window_bounds = array<i64: 1, 8, 128>}]} {
    %c16_i32 = arith.constant 16 : i32
    %0 = arith.muli %arg1, %c16_i32 : i32
    %1 = tpu.assume_multiple %0, 16 : i32
    %c0 = arith.constant 0 : index
    %c0_0 = arith.constant 0 : index
    %c0_1 = arith.constant 0 : index
    %2 = vector.load %arg2[%c0, %c0_0, %c0_1] : memref<1x16x256xbf16, #tpu.memory_space<vmem>>, vector<1x16x256xbf16>
    %3 = vector.shape_cast %2 : vector<1x16x256xbf16> to vector<16x256xbf16>
    %c0_2 = arith.constant 0 : index
    %4 = arith.index_cast %1 : i32 to index
    %c0_3 = arith.constant 0 : index
    %5 = vector.load %arg2[%c0_2, %4, %c0_3] : memref<1x16x256xbf16, #tpu.memory_space<vmem>>, vector<1x16x256xbf16>
    %6 = vector.shape_cast %5 : vector<1x16x256xbf16> to vector<16x256xbf16>
    %cst = arith.constant dense<0.000000e+00> : vector<16x16xf32>
    %7 = tpu.matmul %6, %3, %cst {dimension_numbers = #tpu.dot_dimension_numbers<[1], [1], [0], [0], [0, 0, 1, 0], [], []>} : vector<16x256xbf16>, vector<16x256xbf16>, vector<16x16xf32> -> vector<16x16xf32>
    %8 = arith.index_cast %1 : i32 to index
    %c0_4 = arith.constant 0 : index
    %9 = vector.load %arg3[%8, %c0_4] : memref<16x1xi32, #tpu.memory_space<vmem>>, vector<16x1xi32>
    %c0_5 = arith.constant 0 : index
    %c0_6 = arith.constant 0 : index
    %10 = vector.load %arg4[%c0_5, %c0_6] : memref<1x16xi32, #tpu.memory_space<vmem>>, vector<1x16xi32>
    %11 = vector.broadcast %9 : vector<16x1xi32> to vector<16x16xi32>
    %12 = vector.broadcast %10 : vector<1x16xi32> to vector<16x16xi32>
    %13 = arith.cmpi eq, %11, %12 : vector<16x16xi32>
    %14 = tpu.iota {dimensions = array<i32: 0>} : vector<16x16xi32>
    %15 = vector.broadcast %1 : i32 to vector<16x16xi32>
    %16 = arith.addi %15, %14 : vector<16x16xi32>
    %17 = tpu.iota {dimensions = array<i32: 1>} : vector<16x16xi32>
    %c8_i32 = arith.constant 8 : i32
    %18 = vector.broadcast %c8_i32 : i32 to vector<16x16xi32>
    %19 = arith.cmpi slt, %16, %18 : vector<16x16xi32>
    %c8_i32_7 = arith.constant 8 : i32
    %20 = vector.broadcast %c8_i32_7 : i32 to vector<16x16xi32>
    %21 = arith.cmpi slt, %17, %20 : vector<16x16xi32>
    %22 = arith.andi %19, %21 : vector<16x16xi1>
    %23 = arith.cmpi ne, %16, %17 : vector<16x16xi32>
    %24 = arith.andi %13, %23 : vector<16x16xi1>
    %25 = arith.andi %24, %22 : vector<16x16xi1>
    %cst_8 = arith.constant dense<true> : vector<16x16xi1>
    %26 = arith.xori %13, %cst_8 : vector<16x16xi1>
    %27 = arith.andi %26, %22 : vector<16x16xi1>
    %28 = arith.extui %25 : vector<16x16xi1> to vector<16x16xi32>
    %29 = arith.sitofp %28 : vector<16x16xi32> to vector<16x16xf32>
    %30 = arith.extui %27 : vector<16x16xi1> to vector<16x16xi32>
    %31 = arith.sitofp %30 : vector<16x16xi32> to vector<16x16xf32>
    %cst_9 = arith.constant 1.000000e+30 : f32
    %32 = vector.broadcast %cst_9 : f32 to vector<16x16xf32>
    %33 = arith.select %25, %7, %32 : vector<16x16xi1>, vector<16x16xf32>
    %cst_10 = arith.constant dense<0x7F800000> : vector<16xf32>
    %34 = vector.multi_reduction <minimumf>, %33, %cst_10 [1] : vector<16x16xf32> to vector<16xf32>
    %35 = vector.shape_cast %34 : vector<16xf32> to vector<16x1xf32>
    %cst_11 = arith.constant 5.000000e-02 : f32
    %36 = vector.broadcast %cst_11 : f32 to vector<16x16xf32>
    %37 = arith.addf %7, %36 : vector<16x16xf32>
    %38 = vector.broadcast %35 : vector<16x1xf32> to vector<16x16xf32>
    %39 = arith.cmpf ogt, %37, %38 : vector<16x16xf32>
    %40 = arith.extui %39 : vector<16x16xi1> to vector<16x16xi32>
    %41 = arith.sitofp %40 : vector<16x16xi32> to vector<16x16xf32>
    %42 = arith.mulf %31, %41 : vector<16x16xf32>
    %cst_12 = arith.constant dense<0.000000e+00> : vector<16xf32>
    %43 = vector.multi_reduction <add>, %29, %cst_12 [1] : vector<16x16xf32> to vector<16xf32>
    %44 = vector.shape_cast %43 : vector<16xf32> to vector<16x1xf32>
    %cst_13 = arith.constant dense<0.000000e+00> : vector<16xf32>
    %45 = vector.multi_reduction <add>, %42, %cst_13 [1] : vector<16x16xf32> to vector<16xf32>
    %46 = vector.shape_cast %45 : vector<16xf32> to vector<16x1xf32>
    %cst_14 = arith.constant 5.000000e-01 : f32
    %47 = vector.broadcast %cst_14 : f32 to vector<16x16xf32>
    %48 = arith.subf %7, %47 : vector<16x16xf32>
    %cst_15 = arith.constant -2.000000e+00 : f32
    %49 = vector.broadcast %cst_15 : f32 to vector<16x16xf32>
    %50 = arith.mulf %49, %48 : vector<16x16xf32>
    %cst_16 = arith.constant 0.000000e+00 : f32
    %51 = vector.broadcast %cst_16 : f32 to vector<16x16xf32>
    %52 = arith.maximumf %50, %51 : vector<16x16xf32>
    %53 = math.absf %50 : vector<16x16xf32>
    %cst_17 = arith.constant 0.000000e+00 : f32
    %54 = vector.broadcast %cst_17 : f32 to vector<16x16xf32>
    %55 = arith.subf %54, %53 : vector<16x16xf32>
    %56 = math.exp %55 : vector<16x16xf32>
    %57 = math.log1p %56 : vector<16x16xf32>
    %58 = arith.addf %52, %57 : vector<16x16xf32>
    %59 = arith.mulf %29, %58 : vector<16x16xf32>
    %cst_18 = arith.constant dense<0.000000e+00> : vector<16xf32>
    %60 = vector.multi_reduction <add>, %59, %cst_18 [1] : vector<16x16xf32> to vector<16xf32>
    %61 = vector.shape_cast %60 : vector<16xf32> to vector<16x1xf32>
    %cst_19 = arith.constant 1.000000e+00 : f32
    %62 = vector.broadcast %cst_19 : f32 to vector<16x1xf32>
    %63 = arith.maximumf %44, %62 : vector<16x1xf32>
    %64 = arith.divf %61, %63 : vector<16x1xf32>
    %cst_20 = arith.constant 5.000000e+01 : f32
    %65 = vector.broadcast %cst_20 : f32 to vector<16x16xf32>
    %66 = arith.mulf %65, %48 : vector<16x16xf32>
    %cst_21 = arith.constant 0.000000e+00 : f32
    %67 = vector.broadcast %cst_21 : f32 to vector<16x16xf32>
    %68 = arith.maximumf %66, %67 : vector<16x16xf32>
    %69 = math.absf %66 : vector<16x16xf32>
    %cst_22 = arith.constant 0.000000e+00 : f32
    %70 = vector.broadcast %cst_22 : f32 to vector<16x16xf32>
    %71 = arith.subf %70, %69 : vector<16x16xf32>
    %72 = math.exp %71 : vector<16x16xf32>
    %73 = math.log1p %72 : vector<16x16xf32>
    %74 = arith.addf %68, %73 : vector<16x16xf32>
    %75 = arith.mulf %42, %74 : vector<16x16xf32>
    %cst_23 = arith.constant dense<0.000000e+00> : vector<16xf32>
    %76 = vector.multi_reduction <add>, %75, %cst_23 [1] : vector<16x16xf32> to vector<16xf32>
    %77 = vector.shape_cast %76 : vector<16xf32> to vector<16x1xf32>
    %cst_24 = arith.constant 4.000000e-02 : f32
    %78 = vector.broadcast %cst_24 : f32 to vector<16x1xf32>
    %79 = arith.mulf %78, %77 : vector<16x1xf32>
    %cst_25 = arith.constant 1.000000e+00 : f32
    %80 = vector.broadcast %cst_25 : f32 to vector<16x1xf32>
    %81 = arith.maximumf %46, %80 : vector<16x1xf32>
    %82 = arith.divf %79, %81 : vector<16x1xf32>
    %83 = vector.extract_strided_slice %16 {offsets = [0, 0], sizes = [16, 1], strides = [1, 1]} : vector<16x16xi32> to vector<16x1xi32>
    %c8_i32_26 = arith.constant 8 : i32
    %84 = vector.broadcast %c8_i32_26 : i32 to vector<16x1xi32>
    %85 = arith.cmpi slt, %83, %84 : vector<16x1xi32>
    %86 = arith.extui %85 : vector<16x1xi1> to vector<16x1xi32>
    %87 = arith.sitofp %86 : vector<16x1xi32> to vector<16x1xf32>
    %cst_27 = arith.constant 0.000000e+00 : f32
    %88 = vector.broadcast %cst_27 : f32 to vector<16x1xf32>
    %89 = arith.cmpf ogt, %46, %88 : vector<16x1xf32>
    %90 = arith.extui %89 : vector<16x1xi1> to vector<16x1xi32>
    %91 = arith.sitofp %90 : vector<16x1xi32> to vector<16x1xf32>
    %92 = arith.mulf %87, %91 : vector<16x1xf32>
    %93 = arith.addf %64, %82 : vector<16x1xf32>
    %94 = arith.mulf %92, %93 : vector<16x1xf32>
    %95 = vector.shape_cast %94 : vector<16x1xf32> to vector<1x16x1xf32>
    %cst_28 = arith.constant dense<0.000000e+00> : vector<1xf32>
    %96 = vector.multi_reduction <add>, %95, %cst_28 [1, 2] : vector<1x16x1xf32> to vector<1xf32>
    %97 = vector.shape_cast %96 : vector<1xf32> to vector<1x1x1xf32>
    %98 = vector.extract %97[0, 0, 0] : f32 from vector<1x1x1xf32>
    %cst_29 = arith.constant 1.000000e+00 : f32
    %99 = vector.broadcast %cst_29 : f32 to vector<16x1xf32>
    %100 = arith.subf %99, %91 : vector<16x1xf32>
    %101 = arith.mulf %87, %100 : vector<16x1xf32>
    %102 = vector.shape_cast %101 : vector<16x1xf32> to vector<1x16x1xf32>
    %cst_30 = arith.constant dense<0.000000e+00> : vector<1xf32>
    %103 = vector.multi_reduction <add>, %102, %cst_30 [1, 2] : vector<1x16x1xf32> to vector<1xf32>
    %104 = vector.shape_cast %103 : vector<1xf32> to vector<1x1x1xf32>
    %105 = vector.extract %104[0, 0, 0] : f32 from vector<1x1x1xf32>
    %106 = arith.mulf %29, %7 : vector<16x16xf32>
    %107 = vector.shape_cast %106 : vector<16x16xf32> to vector<1x16x16xf32>
    %cst_31 = arith.constant dense<0.000000e+00> : vector<1xf32>
    %108 = vector.multi_reduction <add>, %107, %cst_31 [1, 2] : vector<1x16x16xf32> to vector<1xf32>
    %109 = vector.shape_cast %108 : vector<1xf32> to vector<1x1x1xf32>
    %110 = vector.extract %109[0, 0, 0] : f32 from vector<1x1x1xf32>
    %111 = arith.mulf %31, %7 : vector<16x16xf32>
    %112 = vector.shape_cast %111 : vector<16x16xf32> to vector<1x16x16xf32>
    %cst_32 = arith.constant dense<0.000000e+00> : vector<1xf32>
    %113 = vector.multi_reduction <add>, %112, %cst_32 [1, 2] : vector<1x16x16xf32> to vector<1xf32>
    %114 = vector.shape_cast %113 : vector<1xf32> to vector<1x1x1xf32>
    %115 = vector.extract %114[0, 0, 0] : f32 from vector<1x1x1xf32>
    %116 = vector.shape_cast %29 : vector<16x16xf32> to vector<1x16x16xf32>
    %cst_33 = arith.constant dense<0.000000e+00> : vector<1xf32>
    %117 = vector.multi_reduction <add>, %116, %cst_33 [1, 2] : vector<1x16x16xf32> to vector<1xf32>
    %118 = vector.shape_cast %117 : vector<1xf32> to vector<1x1x1xf32>
    %119 = vector.extract %118[0, 0, 0] : f32 from vector<1x1x1xf32>
    %120 = vector.shape_cast %31 : vector<16x16xf32> to vector<1x16x16xf32>
    %cst_34 = arith.constant dense<0.000000e+00> : vector<1xf32>
    %121 = vector.multi_reduction <add>, %120, %cst_34 [1, 2] : vector<1x16x16xf32> to vector<1xf32>
    %122 = vector.shape_cast %121 : vector<1xf32> to vector<1x1x1xf32>
    %123 = vector.extract %122[0, 0, 0] : f32 from vector<1x1x1xf32>
    %124 = tpu.iota {dimensions = array<i32: 0>} : vector<8x128xi32>
    %c0_i32 = arith.constant 0 : i32
    %125 = vector.broadcast %c0_i32 : i32 to vector<8x128xi32>
    %126 = arith.cmpi eq, %124, %125 : vector<8x128xi32>
    %cst_35 = arith.constant 0.000000e+00 : f32
    %127 = vector.broadcast %98 : f32 to vector<8x128xf32>
    %128 = vector.broadcast %cst_35 : f32 to vector<8x128xf32>
    %129 = arith.select %126, %127, %128 : vector<8x128xi1>, vector<8x128xf32>
    %c1_i32 = arith.constant 1 : i32
    %130 = vector.broadcast %c1_i32 : i32 to vector<8x128xi32>
    %131 = arith.cmpi eq, %124, %130 : vector<8x128xi32>
    %132 = vector.broadcast %105 : f32 to vector<8x128xf32>
    %133 = arith.select %131, %132, %129 : vector<8x128xi1>, vector<8x128xf32>
    %c2_i32 = arith.constant 2 : i32
    %134 = vector.broadcast %c2_i32 : i32 to vector<8x128xi32>
    %135 = arith.cmpi eq, %124, %134 : vector<8x128xi32>
    %136 = vector.broadcast %110 : f32 to vector<8x128xf32>
    %137 = arith.select %135, %136, %133 : vector<8x128xi1>, vector<8x128xf32>
    %c3_i32 = arith.constant 3 : i32
    %138 = vector.broadcast %c3_i32 : i32 to vector<8x128xi32>
    %139 = arith.cmpi eq, %124, %138 : vector<8x128xi32>
    %140 = vector.broadcast %115 : f32 to vector<8x128xf32>
    %141 = arith.select %139, %140, %137 : vector<8x128xi1>, vector<8x128xf32>
    %c4_i32 = arith.constant 4 : i32
    %142 = vector.broadcast %c4_i32 : i32 to vector<8x128xi32>
    %143 = arith.cmpi eq, %124, %142 : vector<8x128xi32>
    %144 = vector.broadcast %119 : f32 to vector<8x128xf32>
    %145 = arith.select %143, %144, %141 : vector<8x128xi1>, vector<8x128xf32>
    %c5_i32 = arith.constant 5 : i32
    %146 = vector.broadcast %c5_i32 : i32 to vector<8x128xi32>
    %147 = arith.cmpi eq, %124, %146 : vector<8x128xi32>
    %148 = vector.broadcast %123 : f32 to vector<8x128xf32>
    %149 = arith.select %147, %148, %145 : vector<8x128xi1>, vector<8x128xf32>
    %c0_i32_36 = arith.constant 0 : i32
    %150 = arith.cmpi eq, %arg1, %c0_i32_36 : i32
    %151 = arith.extui %150 : i1 to i32
    %c0_i32_37 = arith.constant 0 : i32
    %152 = arith.cmpi ne, %151, %c0_i32_37 : i32
    scf.if %152 {
      %cst_44 = arith.constant 0.000000e+00 : f32
      %159 = vector.broadcast %cst_44 : f32 to vector<8x128xf32>
      %c0_45 = arith.constant 0 : index
      %c0_46 = arith.constant 0 : index
      %c0_47 = arith.constant 0 : index
      %160 = vector.load %arg5[%c0_45, %c0_46, %c0_47] : memref<1x8x128xf32, #tpu.memory_space<vmem>>, vector<1x8x128xf32>
      %161 = vector.shape_cast %160 : vector<1x8x128xf32> to vector<8x128xf32>
      %162 = vector.shape_cast %159 : vector<8x128xf32> to vector<1x8x128xf32>
      tpu.vector_store %arg5[%c0_45, %c0_46, %c0_47], %162 {strides = array<i32>} : memref<1x8x128xf32, #tpu.memory_space<vmem>>, vector<1x8x128xf32>,
    } else {
    }
    %c0_38 = arith.constant 0 : index
    %c0_39 = arith.constant 0 : index
    %c0_40 = arith.constant 0 : index
    %153 = vector.load %arg5[%c0_38, %c0_39, %c0_40] : memref<1x8x128xf32, #tpu.memory_space<vmem>>, vector<1x8x128xf32>
    %154 = vector.shape_cast %153 : vector<1x8x128xf32> to vector<8x128xf32>
    %155 = arith.addf %154, %149 : vector<8x128xf32>
    %c0_41 = arith.constant 0 : index
    %c0_42 = arith.constant 0 : index
    %c0_43 = arith.constant 0 : index
    %156 = vector.load %arg5[%c0_41, %c0_42, %c0_43] : memref<1x8x128xf32, #tpu.memory_space<vmem>>, vector<1x8x128xf32>
    %157 = vector.shape_cast %156 : vector<1x8x128xf32> to vector<8x128xf32>
    %158 = vector.shape_cast %155 : vector<8x128xf32> to vector<1x8x128xf32>
    tpu.vector_store %arg5[%c0_41, %c0_42, %c0_43], %158 {strides = array<i32>} : memref<1x8x128xf32, #tpu.memory_space<vmem>>, vector<1x8x128xf32>,
    return
  }
  func.func @transform_0(%arg0: i32, %arg1: i32) -> (i32, i32, i32) {
    %c0_i32 = arith.constant 0 : i32
    %c0_i32_0 = arith.constant 0 : i32
    %c0_i32_1 = arith.constant 0 : i32
    return %arg0, %c0_i32, %c0_i32_0 : i32, i32, i32
  }
  func.func @transform_1(%arg0: i32, %arg1: i32) -> (i32, i32) {
    %c0_i32 = arith.constant 0 : i32
    %c0_i32_0 = arith.constant 0 : i32
    %c0_i32_1 = arith.constant 0 : i32
    return %c0_i32, %c0_i32_0 : i32, i32
  }
  func.func @transform_2(%arg0: i32, %arg1: i32) -> (i32, i32) {
    %c0_i32 = arith.constant 0 : i32
    %c0_i32_0 = arith.constant 0 : i32
    %c0_i32_1 = arith.constant 0 : i32
    return %c0_i32, %c0_i32_0 : i32, i32
  }
  func.func @transform_3(%arg0: i32, %arg1: i32) -> (i32, i32, i32) {
    %c0_i32 = arith.constant 0 : i32
    %c0_i32_0 = arith.constant 0 : i32
    %c0_i32_1 = arith.constant 0 : i32
    return %arg0, %c0_i32, %c0_i32_0 : i32, i32, i32
  }
}

</mosaic_0001>

<llo_original>
// kernel: tpu_custom_call.1
$region0: #{tpu_custom_call.1}
  #allocation0 [shape = 'u32[]', space=smem, size = 0x4, offset = 0x4, fixed_abs, tag = 'smem constant byte address 0x4 - core index']
  #allocation1 [shape = 'u32[144,128]{1,0:T(1,128)}', space=vmem, size = 0x12000, scoped, tag = 'internal scratch']
  %s0 = inlined_call_operand.hbm [shape: bf16[3,16,256], index: 0, kind: input, shape index: {}]
  %s1 = inlined_call_operand.vmem [shape: s32[16,1], index: 1, kind: input, shape index: {}]
  %s2 = inlined_call_operand.vmem [shape: s32[1,16], index: 2, kind: input, shape index: {}]
  %s3 = inlined_call_operand.hbm [shape: f32[3,8,128], index: 3, kind: output, shape index: {}]
  %s4 = sld [smem:[#allocation0]]
  $region53: #{tpu_custom_call.1} parent=0
    _
  %s6 = ssub.s32 1, %s4
  %s7 = scalar_select 0, %s6, %s4
  $region1: #{tpu_custom_call.1} parent=0
    #allocation2 [shape = 'u8[16384]{0}', space=vmem, size = 0x4000, scoped, tag = 'input window, operand 0']
    #allocation3 [shape = 's32[2]{0}', space=sflag, size = 0x8, scoped, tag = 'scoped memory for tpu_custom_call.1']
    #allocation4 [shape = 's32[2]{0}', space=sflag, size = 0x8, scoped, tag = 'scoped memory for tpu_custom_call.1']
    #allocation5 [shape = 'u8[8192]{0}', space=vmem, size = 0x2000, scoped, tag = 'output window, operand 0']
    %8 = vsyncpa [#allocation3], 0
    %s9 = scalar_lea.sflag [#allocation3], 1
    %10 = vsyncpa %s9, 0
    %11 = vsyncpa [#allocation4], 0
    %s12 = scalar_lea.sflag [#allocation4], 1
    %13 = vsyncpa %s12, 0
    loop: start=0, step=1, limit=5
    $region2: #{tpu_custom_call.1} parent=1 // loop_pre_header
      _
    $region3: #{tpu_custom_call.1} parent=1 // loop_header
      %s15 = sphi 0, %s19
      %p16 = scmp.ge.s32.totalorder %s15, 5
      %s22 = sphi 0, %s34
      %s23 = sphi 0, %s30
      %s24 = sphi 0, %s22
      %s25 = sphi 0, %s23
      %s26 = sphi 0, %s24
      %s27 = sphi 0, %s25
      %s37 = sphi 0, %s39
      %s40 = sphi 0, %s37
      %s41 = sphi 0, %s40
      %s57 = sphi 0, %s41
      %s61 = sphi 0, %s61
      %s63 = sphi 0, %s61
      %s64 = sphi 0, %s63
      %s78 = sphi 0, %s64
      %s82 = sphi 0, %s82
      %s84 = sphi 0, %s82
      %s85 = sphi 0, %s84
      %s99 = sphi 0, %s85
      %s105 = sphi 0, %s107
      %s108 = sphi 0, %s105
      %s109 = sphi 0, %s108
      %s125 = sphi 0, %s109
    $region4: #{tpu_custom_call.1} parent=1 // loop_header_branch
      %18 = sbr.rel (%p16) target = $region8
    $region5: #{tpu_custom_call.1} parent=1 // loop_body
      %s20 = ssub.s32 %s15, 1
      %s21 = ssub.s32 %s15, 2
      %s28 = sadd.s32 1, %s23
      %p29 = scmp.ge.s32.totalorder %s28, 1
      %s30 = scalar_select %p29, 0, %s28
      %s31 = sadd.s32 1, %s22
      %s32 = scalar_select %p29, %s31, %s22
      %p33 = scmp.ge.s32.totalorder %s32, 3
      %s34 = scalar_select %p33, 0, %s32
      %s35 = ssub.s32 %s22, %s34
      %p36 = scmp.eq.s32.totalorder %s35, 0
      %s38 = sadd.s32 %s37, 1
      %s39 = scalar_select %p36, %s37, %s38
      %p42 = pneg %p36
      %p43 = scmp.eq.s32.totalorder %s15, 2
      %p44 = por %p42, %p43
      %p45 = scmp.ne.s32.totalorder %s37, %s40
      %p46 = scmp.eq.s32.totalorder %s15, 0
      %p47 = por %p45, %p46
      %p48 = scmp.ne.s32.totalorder %s37, %s40
      %p49 = scmp.eq.s32.totalorder %s20, 2
      %p50 = por %p48, %p49
      %p51 = scmp.ne.s32.totalorder %s40, %s41
      %p52 = scmp.eq.s32.totalorder %s20, 0
      %p53 = por %p51, %p52
      %p54 = scmp.ne.s32.totalorder %s40, %s41
      %p55 = scmp.eq.s32.totalorder %s21, 2
      %p56 = por %p54, %p55
      %p58 = scmp.ne.s32.totalorder %s41, %s57
      %p59 = scmp.eq.s32.totalorder %s21, 0
      %p60 = por %p58, %p59
      %s62 = sadd.s32 %s61, 1
      %p65 = scmp.eq.s32.totalorder %s15, 2
      %p66 = scmp.ne.s32.totalorder %s61, %s63
      %p67 = scmp.eq.s32.totalorder %s15, 0
      %p68 = por %p66, %p67
      %p69 = scmp.ne.s32.totalorder %s61, %s63
      %p70 = scmp.eq.s32.totalorder %s20, 2
      %p71 = por %p69, %p70
      %p72 = scmp.ne.s32.totalorder %s63, %s64
      %p73 = scmp.eq.s32.totalorder %s20, 0
      %p74 = por %p72, %p73
      %p75 = scmp.ne.s32.totalorder %s63, %s64
      %p76 = scmp.eq.s32.totalorder %s21, 2
      %p77 = por %p75, %p76
      %p79 = scmp.ne.s32.totalorder %s64, %s78
      %p80 = scmp.eq.s32.totalorder %s21, 0
      %p81 = por %p79, %p80
      %s83 = sadd.s32 %s82, 1
      %p86 = scmp.eq.s32.totalorder %s15, 2
      %p87 = scmp.ne.s32.totalorder %s82, %s84
      %p88 = scmp.eq.s32.totalorder %s15, 0
      %p89 = por %p87, %p88
      %p90 = scmp.ne.s32.totalorder %s82, %s84
      %p91 = scmp.eq.s32.totalorder %s20, 2
      %p92 = por %p90, %p91
      %p93 = scmp.ne.s32.totalorder %s84, %s85
      %p94 = scmp.eq.s32.totalorder %s20, 0
      %p95 = por %p93, %p94
      %p96 = scmp.ne.s32.totalorder %s84, %s85
      %p97 = scmp.eq.s32.totalorder %s21, 2
      %p98 = por %p96, %p97
      %p100 = scmp.ne.s32.totalorder %s85, %s99
      %p101 = scmp.eq.s32.totalorder %s21, 0
      %p102 = por %p100, %p101
      %s103 = ssub.s32 %s22, %s34
      %p104 = scmp.eq.s32.totalorder %s103, 0
      %s106 = sadd.s32 %s105, 1
      %s107 = scalar_select %p104, %s105, %s106
      %p110 = pneg %p104
      %p111 = scmp.eq.s32.totalorder %s15, 2
      %p112 = por %p110, %p111
      %p113 = scmp.ne.s32.totalorder %s105, %s108
      %p114 = scmp.eq.s32.totalorder %s15, 0
      %p115 = por %p113, %p114
      %p116 = scmp.ne.s32.totalorder %s105, %s108
      %p117 = scmp.eq.s32.totalorder %s20, 2
      %p118 = por %p116, %p117
      %p119 = scmp.ne.s32.totalorder %s108, %s109
      %p120 = scmp.eq.s32.totalorder %s20, 0
      %p121 = por %p119, %p120
      %p122 = scmp.ne.s32.totalorder %s108, %s109
      %p123 = scmp.eq.s32.totalorder %s21, 2
      %p124 = por %p122, %p123
      %p126 = scmp.ne.s32.totalorder %s109, %s125
      %p127 = scmp.eq.s32.totalorder %s21, 0
      %p128 = por %p126, %p127
      %p129 = scmp.le.s32.totalorder 1, %s15
      %p130 = scmp.lt.s32.totalorder %s15, 4
      %p131 = pnand %p129, %p130
      %p132 = pneg %p131
      // Predicated region
      $region9: #{tpu_custom_call.1} parent=5 // pred_check
        _
      $region10: #{tpu_custom_call.1} parent=5 // pred_check_branch
        %134 = sbr.rel (%p131) target = $region12
      $region11: #{tpu_custom_call.1} parent=5 // pred_region
        %s135 = ssub.s32 %s15, 1
        // Predicated region
        $region13: #{tpu_custom_call.1} parent=11 // pred_check
          %p136 = pneg %p74
        $region14: #{tpu_custom_call.1} parent=11 // pred_check_branch
          %138 = sbr.rel (%p136) target = $region16
        $region15: #{tpu_custom_call.1} parent=11 // pred_region
          _
        $region16: #{tpu_custom_call.1} parent=11 // pred_fallthru
          _
        // Predicated region
        $region17: #{tpu_custom_call.1} parent=11 // pred_check
          %p139 = pneg %p95
        $region18: #{tpu_custom_call.1} parent=11 // pred_check_branch
          %141 = sbr.rel (%p139) target = $region20
        $region19: #{tpu_custom_call.1} parent=11 // pred_region
          _
        $region20: #{tpu_custom_call.1} parent=11 // pred_fallthru
          _
      $region12: #{tpu_custom_call.1} parent=5 // pred_fallthru
        _
      %p142 = scmp.lt.s32.totalorder %s15, 3
      // Predicated region
      $region21: #{tpu_custom_call.1} parent=5 // pred_check
        %p143 = pneg %p142
      $region22: #{tpu_custom_call.1} parent=5 // pred_check_branch
        %145 = sbr.rel (%p143) target = $region24
      $region23: #{tpu_custom_call.1} parent=5 // pred_region
        // Predicated region
        $region25: #{tpu_custom_call.1} parent=23 // pred_check
          %p146 = pneg %p47
        $region26: #{tpu_custom_call.1} parent=23 // pred_check_branch
          %148 = sbr.rel (%p146) target = $region28
        $region27: #{tpu_custom_call.1} parent=23 // pred_region
          %s149 = sand.u32 %s37, 1
          %s150 = scalar_lea.sflag [#allocation3], %s149
          %s151 = sand.u32 %s37, 1
          %s152 = smul.addr %s151, 16
          %s153 = scalar_lea.vmem [#allocation2], %s152
          %s155 = ssub.s32 256, 256
          %156 = vsyncadd %s150, %s155
          %s157 = smul.addr %s22, 4
          %s158 = smul.addr %s157, 64
          %s159 = scalar_lea.hbm %s0, %s158
          %s160 = sshll.u32 %s153, 4
          %s161 = int_to_ptr.vmem [resolvable:$true] %s160
          %166 = dma.hbm_to_vmem [thread:$0]  %s159, 256, %s161, %s150, 128, 128, 8
        $region28: #{tpu_custom_call.1} parent=23 // pred_fallthru
          _
      $region24: #{tpu_custom_call.1} parent=5 // pred_fallthru
        _
      %p167 = scmp.le.s32.totalorder 1, %s15
      %p168 = scmp.lt.s32.totalorder %s15, 4
      %p169 = pnand %p167, %p168
      %p170 = pneg %p169
      // Predicated region
      $region29: #{tpu_custom_call.1} parent=5 // pred_check
        _
      $region30: #{tpu_custom_call.1} parent=5 // pred_check_branch
        %172 = sbr.rel (%p169) target = $region32
      $region31: #{tpu_custom_call.1} parent=5 // pred_region
        %s173 = ssub.s32 %s15, 1
        %s174 = sand.u32 %s40, 1
        %s175 = scalar_lea.sflag [#allocation3], %s174
        %s176 = sand.u32 %s40, 1
        %s177 = smul.addr %s176, 16
        %s178 = scalar_lea.vmem [#allocation2], %s177
        // Predicated region
        $region33: #{tpu_custom_call.1} parent=31 // pred_check
          %p179 = pneg %p53
        $region34: #{tpu_custom_call.1} parent=31 // pred_check_branch
          %181 = sbr.rel (%p179) target = $region36
        $region35: #{tpu_custom_call.1} parent=31 // pred_region
          %182 = dma.done %s175, 256
        $region36: #{tpu_custom_call.1} parent=31 // pred_fallthru
          _
        %s183 = sand.u32 %s40, 1
        %s184 = scalar_lea.sflag [#allocation3], %s183
        %s185 = sand.u32 %s40, 1
        %s186 = smul.addr %s185, 16
        %s187 = scalar_lea.vmem [#allocation2], %s186
        %p188 = pneg %p53
        %p189 = pneg %p50
        %p190 = pneg %p74
        %p191 = pneg %p71
        %p192 = pneg %p95
        %p193 = pneg %p92
        %p194 = pneg %p121
        %p195 = pneg %p118
        %s196 = sand.u32 %s108, 1
        %s197 = scalar_lea.sflag [#allocation4], %s196
        %s198 = sand.u32 %s108, 1
        %s199 = smul.addr %s198, 8
        %s200 = scalar_lea.vmem [#allocation5], %s199
        %s202 = smul.u32 %s25, 16
        %v203 = vld [vmem:[%s178] sm:$0xff]
        %v204 = vld [vmem:[%s178 + $0x8] sm:$0xff]
        %s205 = sshra.s32 %s202, 3
        %s206 = sand.u32 %s202, 7
        %s207 = smul.u32 %s205, 2
        %s208 = smul.addr %s207, 4
        %s209 = scalar_lea.vmem %s178, %s208 [#allocation2]
        %v210 = vld [vmem:[%s209] sm:$0xff]
        %v211 = vld [vmem:[%s209 + $0x8] sm:$0xff]
        %v214 = vunpack.c.l.b16 %v210
        %v215 = vunpack.c.h.b16 %v210
        %v216 = vunpack.c.l.b16 %v211
        %v217 = vunpack.c.h.b16 %v211
        %v218 = vpack.c.b16 %v216, %v214
        %v219 = vpack.c.b16 %v217, %v215
        %v224 = vunpack.c.l.b16 %v203
        %v225 = vunpack.c.h.b16 %v203
        %v226 = vunpack.c.l.b16 %v204
        %v227 = vunpack.c.h.b16 %v204
        %v228 = vpack.c.b16 %v226, %v224
        %v229 = vpack.c.b16 %v227, %v225
        %232 = vmatprep.subr.bf16.mxu0 %v229
        %233 = vmatpush1.bf16.xpose.msra.mxu0 %v228
        %234 = vmatprep.subr.bf16.mxu0 0
        %235 = vmatpush1.bf16.xpose.msra.mxu0 0
        %236 = vmatprep.subr.bf16.mxu0 0
        %237 = vmatpush1.bf16.xpose.msra.mxu0 0
        %238 = vmatprep.subr.bf16.mxu0 0
        %239 = vmatpush1.bf16.xpose.msra.mxu0 0
        %240 = vmatprep.subr.bf16.mxu0 0
        %241 = vmatpush1.bf16.xpose.msra.mxu0 0
        %242 = vmatprep.subr.bf16.mxu0 0
        %243 = vmatpush1.bf16.xpose.msra.mxu0 0
        %244 = vmatprep.subr.bf16.mxu0 0
        %245 = vmatpush1.bf16.xpose.msra.mxu0 0
        %246 = vmatprep.subr.bf16.mxu0 0
        %247 = vmatpush1.bf16.xpose.msra.mxu0 0
        %248 = vmatprep.subr.bf16.mxu0 0
        %249 = vmatpush1.bf16.xpose.msra.mxu0 0
        %250 = vmatprep.subr.bf16.mxu0 0
        %251 = vmatpush1.bf16.xpose.msra.mxu0 0
        %252 = vmatprep.subr.bf16.mxu0 0
        %253 = vmatpush1.bf16.xpose.msra.mxu0 0
        %254 = vmatprep.subr.bf16.mxu0 0
        %255 = vmatpush1.bf16.xpose.msra.mxu0 0
        %256 = vmatprep.subr.bf16.mxu0 0
        %257 = vmatpush1.bf16.xpose.msra.mxu0 0
        %258 = vmatprep.subr.bf16.mxu0 0
        %259 = vmatpush1.bf16.xpose.msra.mxu0 0
        %260 = vmatprep.subr.bf16.mxu0 0
        %261 = vmatpush1.bf16.xpose.msra.mxu0 0
        %262 = vmatprep.subr.bf16.mxu0 0
        %263 = vmatpush1.bf16.xpose.msra.mxu0 0
        %264 = vmatprep.mubr.bf16.mxu0 %v219
        %265 = vmatmul.mubr.bf16.gmra.mrb[0].mxu0 %v218
        %v266 = vpop.f32.mrb[0].mxu0
        %v267 = vadd.f32 0.0, %v266
        %v268 = vpop.f32.mrb[0].mxu0
        %v269 = vpop.f32.mrb[0].mxu0
        %v270 = vadd.f32 0.0, %v269
        %v271 = vpop.f32.mrb[0].mxu0
        %272 = vdwg.mxu0
        %s273 = scalar_lea.vmem %s1, %s202
        %v274 = vld [vmem:[%s273] sm:$0xff]
        %v275 = vld [vmem:[%s273 + $0x8] sm:$0xff]
        %v276 = vld [vmem:[%s2] sm:$0x1]
        %277 = vset.pattern.permute.xlu0 0
        %278 = vperm.xlu0 %277, %v274
        %v279 = vpop.permute.xlu0 %278
        %280 = vset.pattern.permute.xlu0 0
        %281 = vperm.xlu0 %280, %v275
        %v282 = vpop.permute.xlu0 %281
        %v283 = vlaneseq
        %v284 = vshrl.u32 %v283, 7
        %v285 = vsub.s32 0, %v284
        %v286 = vrot.slane %v276, %v285
        %vm287 = vcmp.eq.s32.totalorder %v279, %v286
        %vm288 = vcmp.eq.s32.totalorder %v282, %v286
        %v289 = vlaneseq
        %v290 = vshrl.u32 %v289, 7
        %v291 = vadd.s32 %v290, 8
        %v292 = vstv %s202
        %v293 = vadd.s32 %v292, %v290
        %v294 = vadd.s32 %v292, %v291
        %v295 = vlaneseq
        %v296 = vand.u32 %v295, 127
        %vm297 = vcmp.lt.s32.totalorder %v293, 8
        %vm298 = vcmp.lt.s32.totalorder %v294, 8
        %vm299 = vcmp.lt.s32.totalorder %v296, 8
        %vm300 = vmand %vm297, %vm299
        %vm301 = vmand %vm298, %vm299
        %vm302 = vcmp.ne.s32.totalorder %v293, %v296
        %vm303 = vcmp.ne.s32.totalorder %v294, %v296
        %vm304 = vmand %vm287, %vm302
        %vm305 = vmand %vm288, %vm303
        %vm306 = vmand %vm304, %vm300
        %vm307 = vmand %vm305, %vm301
        %vm308 = vmxor %vm287, 1
        %vm309 = vmxor %vm288, 1
        %vm310 = vmand %vm308, %vm300
        %vm311 = vmand %vm309, %vm301
        %v312 = vsel %vm306, 1, 0
        %v313 = vsel %vm307, 1, 0
        %v314 = vcvt.s32.f32 %v312
        %v315 = vcvt.s32.f32 %v313
        %v316 = vsel %vm310, 1, 0
        %v317 = vsel %vm311, 1, 0
        %v318 = vcvt.s32.f32 %v316
        %v319 = vcvt.s32.f32 %v317
        %v320 = vsel %vm306, %v267, 1e+30
        %v321 = vsel %vm307, %v270, 1e+30
        %vm322 = vcmask 130048
        %v323 = vsel %vm322, %v320, inf
        %324 = vmin.xlane.f32.xlu0 %v323
        %v325 = vpop.xlane.xlu0 %324
        %v326 = vsel %vm322, %v321, inf
        %327 = vmin.xlane.f32.xlu0 %v326
        %v328 = vpop.xlane.xlu0 %327
        %v329 = vadd.f32 %v267, 0.05
        %v330 = vadd.f32 %v270, 0.05
        %vm331 = vcmp.gt.f32.partialorder %v329, %v325
        %vm332 = vcmp.gt.f32.partialorder %v330, %v328
        %v333 = vsel %vm331, 1, 0
        %v334 = vsel %vm332, 1, 0
        %v335 = vcvt.s32.f32 %v333
        %v336 = vcvt.s32.f32 %v334
        %v337 = vmul.f32 %v318, %v335
        %v338 = vmul.f32 %v319, %v336
        %v339 = vsel %vm322, %v314, 0.0
        %340 = vadd.xlane.f32.xlu0 %v339
        %v341 = vpop.xlane.xlu0 %340
        %v342 = vsel %vm322, %v315, 0.0
        %343 = vadd.xlane.f32.xlu0 %v342
        %v344 = vpop.xlane.xlu0 %343
        %v345 = vsel %vm322, %v337, 0.0
        %346 = vadd.xlane.f32.xlu0 %v345
        %v347 = vpop.xlane.xlu0 %346
        %v348 = vsel %vm322, %v338, 0.0
        %349 = vadd.xlane.f32.xlu0 %v348
        %v350 = vpop.xlane.xlu0 %349
        %v351 = vsub.f32 %v267, 0.5
        %v352 = vsub.f32 %v270, 0.5
        %v353 = vmul.f32 %v351, -2.0
        %v354 = vmul.f32 %v352, -2.0
        %v355 = vmax.f32 %v353, 0.0
        %v356 = vmax.f32 %v354, 0.0
        %v357 = vand.u32 2147483647, %v353
        %v358 = vand.u32 2147483647, %v354
        %v359 = vsub.f32 0.0, %v357
        %v360 = vsub.f32 0.0, %v358
        %v361 = vmul.f32 %v359, 1.442695
        %v362 = vpow.pop %v361
        %v363 = vmul.f32 %v360, 1.442695
        %v364 = vpow.pop %v363
        %v365 = vadd.f32 %v362, 1.0
        %v366 = vlog2.pop %v365
        %v367 = vmul.f32 %v366, 0.6931472
        %v368 = vmul.f32 -0.5, %v362
        %v369 = vadd.f32 %v368, 1.0
        %v370 = vmul.f32 %v369, %v362
        %v371 = vand.u32 2147483647, %v362
        %vm372 = vcmp.lt.f32.partialorder %v371, 0.0004427343
        %v373 = vsel %vm372, %v370, %v367
        %v374 = vadd.f32 %v364, 1.0
        %v375 = vlog2.pop %v374
        %v376 = vmul.f32 %v375, 0.6931472
        %v377 = vmul.f32 -0.5, %v364
        %v378 = vadd.f32 %v377, 1.0
        %v379 = vmul.f32 %v378, %v364
        %v380 = vand.u32 2147483647, %v364
        %vm381 = vcmp.lt.f32.partialorder %v380, 0.0004427343
        %v382 = vsel %vm381, %v379, %v376
        %v383 = vadd.f32 %v355, %v373
        %v384 = vadd.f32 %v356, %v382
        %v385 = vmul.f32 %v314, %v383
        %v386 = vmul.f32 %v315, %v384
        %v387 = vsel %vm322, %v385, 0.0
        %388 = vadd.xlane.f32.xlu0 %v387
        %v389 = vpop.xlane.xlu0 %388
        %v390 = vsel %vm322, %v386, 0.0
        %391 = vadd.xlane.f32.xlu0 %v390
        %v392 = vpop.xlane.xlu0 %391
        %v393 = vmax.f32 %v341, 1.0
        %v394 = vmax.f32 %v344, 1.0
        %v395 = vrcp.pop %v393
        %v396 = vmul.f32 %v389, %v395
        %v397 = vrcp.pop %v394
        %v398 = vmul.f32 %v392, %v397
        %v399 = vmul.f32 %v351, 50.0
        %v400 = vmul.f32 %v352, 50.0
        %v401 = vmax.f32 %v399, 0.0
        %v402 = vmax.f32 %v400, 0.0
        %v403 = vand.u32 2147483647, %v399
        %v404 = vand.u32 2147483647, %v400
        %v405 = vsub.f32 0.0, %v403
        %v406 = vsub.f32 0.0, %v404
        %v407 = vmul.f32 %v405, 1.442695
        %v408 = vpow.pop %v407
        %v409 = vmul.f32 %v406, 1.442695
        %v410 = vpow.pop %v409
        %v411 = vadd.f32 %v408, 1.0
        %v412 = vlog2.pop %v411
        %v413 = vmul.f32 %v412, 0.6931472
        %v414 = vmul.f32 -0.5, %v408
        %v415 = vadd.f32 %v414, 1.0
        %v416 = vmul.f32 %v415, %v408
        %v417 = vand.u32 2147483647, %v408
        %vm418 = vcmp.lt.f32.partialorder %v417, 0.0004427343
        %v419 = vsel %vm418, %v416, %v413
        %v420 = vadd.f32 %v410, 1.0
        %v421 = vlog2.pop %v420
        %v422 = vmul.f32 %v421, 0.6931472
        %v423 = vmul.f32 -0.5, %v410
        %v424 = vadd.f32 %v423, 1.0
        %v425 = vmul.f32 %v424, %v410
        %v426 = vand.u32 2147483647, %v410
        %vm427 = vcmp.lt.f32.partialorder %v426, 0.0004427343
        %v428 = vsel %vm427, %v425, %v422
        %v429 = vadd.f32 %v401, %v419
        %v430 = vadd.f32 %v402, %v428
        %v431 = vmul.f32 %v337, %v429
        %v432 = vmul.f32 %v338, %v430
        %v433 = vsel %vm322, %v431, 0.0
        %434 = vadd.xlane.f32.xlu0 %v433
        %v435 = vpop.xlane.xlu0 %434
        %v436 = vsel %vm322, %v432, 0.0
        %437 = vadd.xlane.f32.xlu0 %v436
        %v438 = vpop.xlane.xlu0 %437
        %v439 = vmul.f32 %v435, 0.04
        %v440 = vmul.f32 %v438, 0.04
        %v441 = vmax.f32 %v347, 1.0
        %v442 = vmax.f32 %v350, 1.0
        %v443 = vrcp.pop %v441
        %v444 = vmul.f32 %v439, %v443
        %v445 = vrcp.pop %v442
        %v446 = vmul.f32 %v440, %v445
        %v447 = vsel %vm297, 1, 0
        %v448 = vsel %vm298, 1, 0
        %v449 = vcvt.s32.f32 %v447
        %v450 = vcvt.s32.f32 %v448
        %vm451 = vcmp.gt.f32.partialorder %v347, 0.0
        %vm452 = vcmp.gt.f32.partialorder %v350, 0.0
        %v453 = vsel %vm451, 1, 0
        %v454 = vsel %vm452, 1, 0
        %v455 = vcvt.s32.f32 %v453
        %v456 = vcvt.s32.f32 %v454
        %v457 = vmul.f32 %v449, %v455
        %v458 = vmul.f32 %v450, %v456
        %v459 = vadd.f32 %v396, %v444
        %v460 = vadd.f32 %v398, %v446
        %v461 = vmul.f32 %v457, %v459
        %v462 = vmul.f32 %v458, %v460
        %vm463 = vcmask 7168
        %v464 = vsel %vm463, %v461, 0.0
        %v465 = vsel %vm463, %v462, 0.0
        %v466 = vadd.f32 %v464, %v465
        %467 = vadd.xlane.f32.xlu0 %v466
        %v468 = vpop.xlane.xlu0 %467
        %v469 = vrot.slane %v468, 4
        %v470 = vadd.f32 %v468, %v469
        %v471 = vrot.slane %v470, 2
        %v472 = vadd.f32 %v470, %v471
        %v473 = vrot.slane %v472, 1
        %v474 = vadd.f32 %v472, %v473
        %s475 = vtos %v474
        %v476 = vsub.f32 1.0, %v455
        %v477 = vsub.f32 1.0, %v456
        %v478 = vmul.f32 %v449, %v476
        %v479 = vmul.f32 %v450, %v477
        %v480 = vsel %vm463, %v478, 0.0
        %v481 = vsel %vm463, %v479, 0.0
        %v482 = vadd.f32 %v480, %v481
        %483 = vadd.xlane.f32.xlu0 %v482
        %v484 = vpop.xlane.xlu0 %483
        %v485 = vrot.slane %v484, 4
        %v486 = vadd.f32 %v484, %v485
        %v487 = vrot.slane %v486, 2
        %v488 = vadd.f32 %v486, %v487
        %v489 = vrot.slane %v488, 1
        %v490 = vadd.f32 %v488, %v489
        %s491 = vtos %v490
        %v492 = vmul.f32 %v314, %v267
        %v493 = vmul.f32 %v315, %v270
        %v494 = vsel %vm322, %v492, 0.0
        %v495 = vsel %vm322, %v493, 0.0
        %v496 = vadd.f32 %v494, %v495
        %497 = vadd.xlane.f32.xlu0 %v496
        %v498 = vpop.xlane.xlu0 %497
        %v499 = vrot.slane %v498, 4
        %v500 = vadd.f32 %v498, %v499
        %v501 = vrot.slane %v500, 2
        %v502 = vadd.f32 %v500, %v501
        %v503 = vrot.slane %v502, 1
        %v504 = vadd.f32 %v502, %v503
        %s505 = vtos %v504
        %v506 = vmul.f32 %v318, %v267
        %v507 = vmul.f32 %v319, %v270
        %v508 = vsel %vm322, %v506, 0.0
        %v509 = vsel %vm322, %v507, 0.0
        %v510 = vadd.f32 %v508, %v509
        %511 = vadd.xlane.f32.xlu0 %v510
        %v512 = vpop.xlane.xlu0 %511
        %v513 = vrot.slane %v512, 4
        %v514 = vadd.f32 %v512, %v513
        %v515 = vrot.slane %v514, 2
        %v516 = vadd.f32 %v514, %v515
        %v517 = vrot.slane %v516, 1
        %v518 = vadd.f32 %v516, %v517
        %s519 = vtos %v518
        %v520 = vadd.f32 %v339, %v342
        %521 = vadd.xlane.f32.xlu0 %v520
        %v522 = vpop.xlane.xlu0 %521
        %v523 = vrot.slane %v522, 4
        %v524 = vadd.f32 %v522, %v523
        %v525 = vrot.slane %v524, 2
        %v526 = vadd.f32 %v524, %v525
        %v527 = vrot.slane %v526, 1
        %v528 = vadd.f32 %v526, %v527
        %s529 = vtos %v528
        %v530 = vsel %vm322, %v318, 0.0
        %v531 = vsel %vm322, %v319, 0.0
        %v532 = vadd.f32 %v530, %v531
        %533 = vadd.xlane.f32.xlu0 %v532
        %v534 = vpop.xlane.xlu0 %533
        %v535 = vrot.slane %v534, 4
        %v536 = vadd.f32 %v534, %v535
        %v537 = vrot.slane %v536, 2
        %v538 = vadd.f32 %v536, %v537
        %v539 = vrot.slane %v538, 1
        %v540 = vadd.f32 %v538, %v539
        %s541 = vtos %v540
        %vm542 = vcmp.eq.s32.totalorder %v290, 0
        %v543 = vstv %s475
        %v544 = vsel %vm542, %v543, 0.0
        %vm545 = vcmp.eq.s32.totalorder %v290, 1
        %v546 = vstv %s491
        %v547 = vsel %vm545, %v546, %v544
        %vm548 = vcmp.eq.s32.totalorder %v290, 2
        %v549 = vstv %s505
        %v550 = vsel %vm548, %v549, %v547
        %vm551 = vcmp.eq.s32.totalorder %v290, 3
        %v552 = vstv %s519
        %v553 = vsel %vm551, %v552, %v550
        %vm554 = vcmp.eq.s32.totalorder %v290, 4
        %v555 = vstv %s529
        %v556 = vsel %vm554, %v555, %v553
        %vm557 = vcmp.eq.s32.totalorder %v290, 5
        %v558 = vstv %s541
        %v559 = vsel %vm557, %v558, %v556
        %p560 = scmp.eq.s32.totalorder %s25, 0
        // Predicated region
        $region37: #{tpu_custom_call.1} parent=31 // pred_check
          %p561 = pneg %p560
        $region38: #{tpu_custom_call.1} parent=31 // pred_check_branch
          %563 = sbr.rel (%p561) target = $region40
        $region39: #{tpu_custom_call.1} parent=31 // pred_region
          %564 = vst [vmem:[%s200] sm:$0xff] 0.0
        $region40: #{tpu_custom_call.1} parent=31 // pred_fallthru
          _
        %v565 = vld [vmem:[%s200] sm:$0xff]
        %v566 = vadd.f32 %v565, %v559
        %567 = vst [vmem:[%s200] sm:$0xff] %v566
        %s568 = sand.u32 %s108, 1
        %s569 = scalar_lea.sflag [#allocation4], %s568
        %s570 = sand.u32 %s108, 1
        %s571 = smul.addr %s570, 8
        %s572 = scalar_lea.vmem [#allocation5], %s571
        // Predicated region
        $region41: #{tpu_custom_call.1} parent=31 // pred_check
          %p573 = pneg %p118
        $region42: #{tpu_custom_call.1} parent=31 // pred_check_branch
          %575 = sbr.rel (%p573) target = $region44
        $region43: #{tpu_custom_call.1} parent=31 // pred_region
          %s577 = ssub.s32 128, 128
          %578 = vsyncadd %s569, %s577
          %s579 = smul.addr %s24, 128
          %s580 = scalar_lea.hbm %s3, %s579
          %s582 = sshll.u32 %s572, 4
          %s583 = int_to_ptr.vmem [resolvable:$true] %s582
          %585 = dma.vmem_to_hbm [thread:$0]  %s583, 128, %s580, %s569
        $region44: #{tpu_custom_call.1} parent=31 // pred_fallthru
          _
      $region32: #{tpu_custom_call.1} parent=5 // pred_fallthru
        _
      %p586 = scmp.le.s32.totalorder 2, %s15
      // Predicated region
      $region45: #{tpu_custom_call.1} parent=5 // pred_check
        %p587 = pneg %p586
      $region46: #{tpu_custom_call.1} parent=5 // pred_check_branch
        %589 = sbr.rel (%p587) target = $region48
      $region47: #{tpu_custom_call.1} parent=5 // pred_region
        %s590 = ssub.s32 %s15, 2
        // Predicated region
        $region49: #{tpu_custom_call.1} parent=47 // pred_check
          %p591 = pneg %p124
        $region50: #{tpu_custom_call.1} parent=47 // pred_check_branch
          %593 = sbr.rel (%p591) target = $region52
        $region51: #{tpu_custom_call.1} parent=47 // pred_region
          %s594 = sand.u32 %s109, 1
          %s595 = scalar_lea.sflag [#allocation4], %s594
          %s596 = sand.u32 %s109, 1
          %s597 = smul.addr %s596, 8
          %s598 = scalar_lea.vmem [#allocation5], %s597
          %599 = dma.done %s595, 128
        $region52: #{tpu_custom_call.1} parent=47 // pred_fallthru
          _
      $region48: #{tpu_custom_call.1} parent=5 // pred_fallthru
        _
    $region6: #{tpu_custom_call.1} parent=1 // loop_footer
      %s19 = sadd.s32 1, %s15
    $region7: #{tpu_custom_call.1} parent=1 // loop_footer_branch
      %14 = sbr.rel target = $region3
    $region8: #{tpu_custom_call.1} parent=1 // loop_exit
      _
    %600 = vsyncpa [#allocation3], 1
    %s601 = scalar_lea.sflag [#allocation3], 1
    %602 = vsyncpa %s601, 1
    %603 = vsyncpa [#allocation4], 1
    %s604 = scalar_lea.sflag [#allocation4], 1
    %605 = vsyncpa %s604, 1

</llo_original>
